<compile_context>
chip_gen: v5e
topology: v5e:2x2
jax: 0.10.0
libtpu: 0.0.40
codegen_flags: <defaults>
</compile_context>

<pallas_src>
import functools

import jax
import jax.numpy as jnp
from jax.experimental import pallas as pl
from jax.experimental.pallas import tpu as pltpu


def _pick_c_tile(C: int, L: int, itemsize: int, budget_bytes: int = 8 * 1024 * 1024) -> int:
    """Pick a channel tile: full C when small, else a multiple of 128 dividing C,
    sized so (2x in + 2x out + padded scratch) stays within `budget_bytes`."""
    per_chan = max(5 * L * itemsize, 1)          # ~ double-buffered in/out + scratch
    max_ct = max(budget_bytes // per_chan, 128)
    if C <= max_ct:
        return C                                  # full dim (always legal as last block dim)
    ct = (max_ct // 128) * 128
    while ct >= 128:
        if C % ct == 0:
            return ct
        ct -= 128
    return C                                      # ragged C: fall back to full channels


def _make_moving_avg_kernel(kernel_size: int, pad: int, L: int, l_out: int, ct: int):
    inv_k = 1.0 / float(kernel_size)
    l_pad = L + 2 * pad

    def kernel(x_ref, o_ref, xp_ref):
        # x_ref : (1, L, ct)      input tile (one batch element, one channel tile)
        # o_ref : (1, l_out, ct)  output tile (stride-1 moving average)
        # xp_ref: (l_pad, ct)     VMEM scratch holding the edge-replicated sequence
        x = x_ref[0, :, :]                                   # (L, ct)

        # Build the padded sequence in VMEM (this replaces the HBM repeat+concat).
        xp_ref[pad:pad + L, :] = x
        if pad > 0:
            xp_ref[0:pad, :] = jnp.broadcast_to(x[0:1, :], (pad, ct))
            xp_ref[pad + L:l_pad, :] = jnp.broadcast_to(x[L - 1:L, :], (pad, ct))

        # Windowed sum of k shifted (contiguous, stride-1) slices, f32 accumulation.
        acc = xp_ref[0:l_out, :].astype(jnp.float32)         # init with first window
        for j in range(1, kernel_size):                      # static unrolled loop
            acc = acc + xp_ref[j:j + l_out, :].astype(jnp.float32)

        o_ref[0, :, :] = (acc * inv_k).astype(o_ref.dtype)

    return kernel


@functools.partial(jax.jit, static_argnames=("kernel_size", "stride"))
def moving_avg(x, *, kernel_size: int, stride: int):
    """x: (B, L, C) -> (B, L_out, C), matching torch moving_avg.forward."""
    B, L, C = x.shape
    pad = (kernel_size - 1) // 2
    L_pad = L + 2 * pad
    L_out1 = L_pad - kernel_size + 1                 # stride-1 output length
    assert L_out1 >= 1, "kernel_size too large for this sequence length"

    itemsize = jnp.dtype(x.dtype).itemsize
    Ct = _pick_c_tile(C, L, itemsize)
    n_ct = C // Ct if C % Ct == 0 else 1
    if C % Ct != 0:
        Ct = C

    kernel = _make_moving_avg_kernel(kernel_size, pad, L, L_out1, Ct)

    cost = pl.CostEstimate(
        flops=B * L_out1 * C * kernel_size,
        transcendentals=0,
        bytes_accessed=B * C * (L + L_out1) * itemsize,
    )

    out_full = pl.pallas_call(
        kernel,
        out_shape=jax.ShapeDtypeStruct((B, L_out1, C), x.dtype),
        grid=(B, n_ct),
        in_specs=[pl.BlockSpec((1, L, Ct), lambda b, c: (b, 0, c))],
        out_specs=pl.BlockSpec((1, L_out1, Ct), lambda b, c: (b, 0, c)),
        scratch_shapes=[pltpu.VMEM((L_pad, Ct), x.dtype)],
        compiler_params=pltpu.CompilerParams(
            dimension_semantics=("parallel", "parallel")),
        cost_estimate=cost,
    )(x)

    if stride == 1:
        return out_full
    # stride > 1: AvgPool1d picks every stride-th stride-1 window; subsample outside
    # the kernel so the hot loop only does contiguous sublane loads.
    L_out_s = (L_pad - kernel_size) // stride + 1
    return out_full[:, ::stride, :][:, :L_out_s, :]


def moving_avg_ref(x, *, kernel_size: int, stride: int):
    """Pure-JAX reference mirroring the PyTorch module."""
    pad = (kernel_size - 1) // 2
    front = jnp.repeat(x[:, 0:1, :], pad, axis=1)
    end = jnp.repeat(x[:, -1:, :], pad, axis=1)
    xp = jnp.concatenate([front, x, end], axis=1)
    L_pad = xp.shape[1]
    L_out = (L_pad - kernel_size) // stride + 1
    acc = None
    for j in range(kernel_size):
        sl = xp[:, j:j + (L_out - 1) * stride + 1:stride, :]
        acc = sl if acc is None else acc + sl
    return acc / kernel_size


if __name__ == "__main__":
    # Default Autoformer usage: kernel_size=11 (as in the source snippet), stride=1.
    kernel_size, stride = 11, 1

    key = jax.random.PRNGKey(0)
    B, L, C = 2, 16, 8  # (batch, seq, channels)
    x = jax.random.normal(key, (B, L, C), dtype=jnp.float32)

    out = jax.block_until_ready(moving_avg(x, kernel_size=kernel_size, stride=stride))
    ref = moving_avg_ref(x, kernel_size=kernel_size, stride=stride)
    assert out.shape == ref.shape, (out.shape, ref.shape)
    assert jnp.max(jnp.abs(out - ref)) < 1e-5

    # Channel-tiled, lane-dense path (C a multiple of 128, multiple channel tiles).
    x2 = jax.random.normal(jax.random.PRNGKey(1), (2, 512, 1024), dtype=jnp.float32)
    out2 = jax.block_until_ready(moving_avg(x2, kernel_size=25, stride=1))
    ref2 = moving_avg_ref(x2, kernel_size=25, stride=1)
    assert out2.shape == ref2.shape, (out2.shape, ref2.shape)
    assert jnp.max(jnp.abs(out2 - ref2)) < 1e-4

    # stride > 1 path (wrapper-side subsampling of the stride-1 result).
    out3 = jax.block_until_ready(moving_avg(x, kernel_size=4, stride=2))
    ref3 = moving_avg_ref(x, kernel_size=4, stride=2)
    assert out3.shape == ref3.shape, (out3.shape, ref3.shape)
    assert jnp.max(jnp.abs(out3 - ref3)) < 1e-5

    print("KERNEL_OK")
</pallas_src>

<mosaic_0001>
module attributes {stable_mosaic.version = 11 : i64} {
  func.func @kernel(%arg0: i32, %arg1: i32, %arg2: memref<1x16x8xf32, #tpu.memory_space<vmem>>, %arg3: memref<1x16x8xf32, #tpu.memory_space<vmem>>, %arg4: memref<26x8xf32, #tpu.memory_space<vmem>>) attributes {dimension_semantics = [#tpu.dimension_semantics<parallel>, #tpu.dimension_semantics<parallel>], iteration_bounds = array<i64: 2, 1>, scalar_prefetch = 0 : i64, scratch_operands = 1 : i64, tpu.core_type = #tpu.core_type<tc>, window_params = [{transform_indices = @transform_0, window_bounds = array<i64: 1, 16, 8>}, {transform_indices = @transform_1, window_bounds = array<i64: 1, 16, 8>}]} {
    %c0 = arith.constant 0 : index
    %c0_0 = arith.constant 0 : index
    %c0_1 = arith.constant 0 : index
    %0 = vector.load %arg2[%c0, %c0_0, %c0_1] : memref<1x16x8xf32, #tpu.memory_space<vmem>>, vector<1x16x8xf32>
    %1 = vector.shape_cast %0 : vector<1x16x8xf32> to vector<16x8xf32>
    %c5 = arith.constant 5 : index
    %c0_2 = arith.constant 0 : index
    %2 = vector.load %arg4[%c5, %c0_2] : memref<26x8xf32, #tpu.memory_space<vmem>>, vector<16x8xf32>
    tpu.vector_store %arg4[%c5, %c0_2], %1 {strides = array<i32>} : memref<26x8xf32, #tpu.memory_space<vmem>>, vector<16x8xf32>,
    %3 = vector.extract_strided_slice %1 {offsets = [0, 0], sizes = [1, 8], strides = [1, 1]} : vector<16x8xf32> to vector<1x8xf32>
    %4 = vector.shape_cast %3 : vector<1x8xf32> to vector<1x8xf32>
    %5 = vector.broadcast %4 : vector<1x8xf32> to vector<5x8xf32>
    %c0_3 = arith.constant 0 : index
    %c0_4 = arith.constant 0 : index
    %6 = vector.load %arg4[%c0_3, %c0_4] : memref<26x8xf32, #tpu.memory_space<vmem>>, vector<5x8xf32>
    tpu.vector_store %arg4[%c0_3, %c0_4], %5 {strides = array<i32>} : memref<26x8xf32, #tpu.memory_space<vmem>>, vector<5x8xf32>,
    %7 = vector.extract_strided_slice %1 {offsets = [15, 0], sizes = [1, 8], strides = [1, 1]} : vector<16x8xf32> to vector<1x8xf32>
    %8 = vector.shape_cast %7 : vector<1x8xf32> to vector<1x8xf32>
    %9 = vector.broadcast %8 : vector<1x8xf32> to vector<5x8xf32>
    %c21 = arith.constant 21 : index
    %c0_5 = arith.constant 0 : index
    %10 = vector.load %arg4[%c21, %c0_5] : memref<26x8xf32, #tpu.memory_space<vmem>>, vector<5x8xf32>
    tpu.vector_store %arg4[%c21, %c0_5], %9 {strides = array<i32>} : memref<26x8xf32, #tpu.memory_space<vmem>>, vector<5x8xf32>,
    %c0_6 = arith.constant 0 : index
    %c0_7 = arith.constant 0 : index
    %11 = vector.load %arg4[%c0_6, %c0_7] : memref<26x8xf32, #tpu.memory_space<vmem>>, vector<16x8xf32>
    %c1 = arith.constant 1 : index
    %c0_8 = arith.constant 0 : index
    %12 = vector.load %arg4[%c1, %c0_8] : memref<26x8xf32, #tpu.memory_space<vmem>>, vector<16x8xf32>
    %13 = arith.addf %11, %12 : vector<16x8xf32>
    %c2 = arith.constant 2 : index
    %c0_9 = arith.constant 0 : index
    %14 = vector.load %arg4[%c2, %c0_9] : memref<26x8xf32, #tpu.memory_space<vmem>>, vector<16x8xf32>
    %15 = arith.addf %13, %14 : vector<16x8xf32>
    %c3 = arith.constant 3 : index
    %c0_10 = arith.constant 0 : index
    %16 = vector.load %arg4[%c3, %c0_10] : memref<26x8xf32, #tpu.memory_space<vmem>>, vector<16x8xf32>
    %17 = arith.addf %15, %16 : vector<16x8xf32>
    %c4 = arith.constant 4 : index
    %c0_11 = arith.constant 0 : index
    %18 = vector.load %arg4[%c4, %c0_11] : memref<26x8xf32, #tpu.memory_space<vmem>>, vector<16x8xf32>
    %19 = arith.addf %17, %18 : vector<16x8xf32>
    %c5_12 = arith.constant 5 : index
    %c0_13 = arith.constant 0 : index
    %20 = vector.load %arg4[%c5_12, %c0_13] : memref<26x8xf32, #tpu.memory_space<vmem>>, vector<16x8xf32>
    %21 = arith.addf %19, %20 : vector<16x8xf32>
    %c6 = arith.constant 6 : index
    %c0_14 = arith.constant 0 : index
    %22 = vector.load %arg4[%c6, %c0_14] : memref<26x8xf32, #tpu.memory_space<vmem>>, vector<16x8xf32>
    %23 = arith.addf %21, %22 : vector<16x8xf32>
    %c7 = arith.constant 7 : index
    %c0_15 = arith.constant 0 : index
    %24 = vector.load %arg4[%c7, %c0_15] : memref<26x8xf32, #tpu.memory_space<vmem>>, vector<16x8xf32>
    %25 = arith.addf %23, %24 : vector<16x8xf32>
    %c8 = arith.constant 8 : index
    %c0_16 = arith.constant 0 : index
    %26 = vector.load %arg4[%c8, %c0_16] : memref<26x8xf32, #tpu.memory_space<vmem>>, vector<16x8xf32>
    %27 = arith.addf %25, %26 : vector<16x8xf32>
    %c9 = arith.constant 9 : index
    %c0_17 = arith.constant 0 : index
    %28 = vector.load %arg4[%c9, %c0_17] : memref<26x8xf32, #tpu.memory_space<vmem>>, vector<16x8xf32>
    %29 = arith.addf %27, %28 : vector<16x8xf32>
    %c10 = arith.constant 10 : index
    %c0_18 = arith.constant 0 : index
    %30 = vector.load %arg4[%c10, %c0_18] : memref<26x8xf32, #tpu.memory_space<vmem>>, vector<16x8xf32>
    %31 = arith.addf %29, %30 : vector<16x8xf32>
    %cst = arith.constant 0.0909090936 : f32
    %32 = vector.broadcast %cst : f32 to vector<16x8xf32>
    %33 = arith.mulf %31, %32 : vector<16x8xf32>
    %c0_19 = arith.constant 0 : index
    %c0_20 = arith.constant 0 : index
    %c0_21 = arith.constant 0 : index
    %34 = vector.load %arg3[%c0_19, %c0_20, %c0_21] : memref<1x16x8xf32, #tpu.memory_space<vmem>>, vector<1x16x8xf32>
    %35 = vector.shape_cast %34 : vector<1x16x8xf32> to vector<16x8xf32>
    %36 = vector.shape_cast %33 : vector<16x8xf32> to vector<1x16x8xf32>
    tpu.vector_store %arg3[%c0_19, %c0_20, %c0_21], %36 {strides = array<i32>} : memref<1x16x8xf32, #tpu.memory_space<vmem>>, vector<1x16x8xf32>,
    return
  }
  func.func @transform_0(%arg0: i32, %arg1: i32) -> (i32, i32, i32) {
    %c0_i32 = arith.constant 0 : i32
    %c0_i32_0 = arith.constant 0 : i32
    return %arg0, %c0_i32, %arg1 : i32, i32, i32
  }
  func.func @transform_1(%arg0: i32, %arg1: i32) -> (i32, i32, i32) {
    %c0_i32 = arith.constant 0 : i32
    %c0_i32_0 = arith.constant 0 : i32
    return %arg0, %c0_i32, %arg1 : i32, i32, i32
  }
}

</mosaic_0001>

<llo_original>
// kernel: moving_avg.1
$region0: #{moving_avg.1}
  #allocation0 [shape = 'u32[]', space=smem, size = 0x4, offset = 0x4, fixed_abs, tag = 'smem constant byte address 0x4 - core index']
  #allocation1 [shape = 'u32[72,128]{1,0:T(1,128)}', space=vmem, size = 0x9000, scoped, tag = 'internal scratch']
  #allocation2 [shape = 'f32[26,8]{1,0:T(8,128)}', space=vmem, size = 0x4000, scoped, tag = 'scratch operand']
  %s0 = inlined_call_operand.vmem [shape: f32[2,16,8], index: 0, kind: input, shape index: {}]
  %s1 = inlined_call_operand.vmem [shape: f32[2,16,8], index: 1, kind: output, shape index: {}]
  %s2 = sld [smem:[#allocation0]]
  $region37: #{moving_avg.1} parent=0
    _
  %s4 = ssub.s32 1, %s2
  %s5 = scalar_select 0, %s4, %s2
  loop: start=0, step=1, limit=4
  $region2: #{moving_avg.1} parent=0 // loop_pre_header
    _
  $region3: #{moving_avg.1} parent=0 // loop_header
    %s7 = sphi 0, %s11
    %p8 = scmp.ge.s32.totalorder %s7, 4
    %s14 = sphi 0, %s26
    %s15 = sphi 0, %s22
    %s16 = sphi 0, %s14
    %s17 = sphi 0, %s15
    %s18 = sphi 0, %s16
    %s19 = sphi 0, %s17
    %s31 = sphi 0, %s33
    %s34 = sphi 0, %s31
    %s35 = sphi 0, %s34
    %s51 = sphi 0, %s35
    %s59 = sphi 0, %s61
    %s62 = sphi 0, %s59
    %s63 = sphi 0, %s62
    %s79 = sphi 0, %s63
  $region4: #{moving_avg.1} parent=0 // loop_header_branch
    %10 = sbr.rel (%p8) target = $region8
  $region5: #{moving_avg.1} parent=0 // loop_body
    %s12 = ssub.s32 %s7, 1
    %s13 = ssub.s32 %s7, 2
    %s20 = sadd.s32 1, %s15
    %p21 = scmp.ge.s32.totalorder %s20, 1
    %s22 = scalar_select %p21, 0, %s20
    %s23 = sadd.s32 1, %s14
    %s24 = scalar_select %p21, %s23, %s14
    %p25 = scmp.ge.s32.totalorder %s24, 2
    %s26 = scalar_select %p25, 0, %s24
    %s27 = ssub.s32 %s14, %s26
    %s28 = ssub.s32 %s15, %s22
    %s29 = sor.u32 %s27, %s28
    %p30 = scmp.eq.s32.totalorder %s29, 0
    %s32 = sadd.s32 %s31, 1
    %s33 = scalar_select %p30, %s31, %s32
    %p36 = pneg %p30
    %p37 = scmp.eq.s32.totalorder %s7, 1
    %p38 = por %p36, %p37
    %p39 = scmp.ne.s32.totalorder %s31, %s34
    %p40 = scmp.eq.s32.totalorder %s7, 0
    %p41 = por %p39, %p40
    %p42 = scmp.ne.s32.totalorder %s31, %s34
    %p43 = scmp.eq.s32.totalorder %s12, 1
    %p44 = por %p42, %p43
    %p45 = scmp.ne.s32.totalorder %s34, %s35
    %p46 = scmp.eq.s32.totalorder %s12, 0
    %p47 = por %p45, %p46
    %p48 = scmp.ne.s32.totalorder %s34, %s35
    %p49 = scmp.eq.s32.totalorder %s13, 1
    %p50 = por %p48, %p49
    %p52 = scmp.ne.s32.totalorder %s35, %s51
    %p53 = scmp.eq.s32.totalorder %s13, 0
    %p54 = por %p52, %p53
    %s55 = ssub.s32 %s14, %s26
    %s56 = ssub.s32 %s15, %s22
    %s57 = sor.u32 %s55, %s56
    %p58 = scmp.eq.s32.totalorder %s57, 0
    %s60 = sadd.s32 %s59, 1
    %s61 = scalar_select %p58, %s59, %s60
    %p64 = pneg %p58
    %p65 = scmp.eq.s32.totalorder %s7, 1
    %p66 = por %p64, %p65
    %p67 = scmp.ne.s32.totalorder %s59, %s62
    %p68 = scmp.eq.s32.totalorder %s7, 0
    %p69 = por %p67, %p68
    %p70 = scmp.ne.s32.totalorder %s59, %s62
    %p71 = scmp.eq.s32.totalorder %s12, 1
    %p72 = por %p70, %p71
    %p73 = scmp.ne.s32.totalorder %s62, %s63
    %p74 = scmp.eq.s32.totalorder %s12, 0
    %p75 = por %p73, %p74
    %p76 = scmp.ne.s32.totalorder %s62, %s63
    %p77 = scmp.eq.s32.totalorder %s13, 1
    %p78 = por %p76, %p77
    %p80 = scmp.ne.s32.totalorder %s63, %s79
    %p81 = scmp.eq.s32.totalorder %s13, 0
    %p82 = por %p80, %p81
    %p83 = scmp.le.s32.totalorder 1, %s7
    %p84 = scmp.lt.s32.totalorder %s7, 3
    %p85 = pnand %p83, %p84
    %p86 = pneg %p85
    // Predicated region
    $region9: #{moving_avg.1} parent=5 // pred_check
      _
    $region10: #{moving_avg.1} parent=5 // pred_check_branch
      %88 = sbr.rel (%p85) target = $region12
    $region11: #{moving_avg.1} parent=5 // pred_region
      %s89 = ssub.s32 %s7, 1
    $region12: #{moving_avg.1} parent=5 // pred_fallthru
      _
    %p90 = scmp.lt.s32.totalorder %s7, 2
    // Predicated region
    $region13: #{moving_avg.1} parent=5 // pred_check
      %p91 = pneg %p90
    $region14: #{moving_avg.1} parent=5 // pred_check_branch
      %93 = sbr.rel (%p91) target = $region16
    $region15: #{moving_avg.1} parent=5 // pred_region
      // Predicated region
      $region17: #{moving_avg.1} parent=15 // pred_check
        %p94 = pneg %p41
      $region18: #{moving_avg.1} parent=15 // pred_check_branch
        %96 = sbr.rel (%p94) target = $region20
      $region19: #{moving_avg.1} parent=15 // pred_region
        %p97 = scmp.lt.s32.totalorder %s14, 1
        %s98 = scalar_select %p97, %s14, 1
        %p99 = scmp.lt.s32.totalorder %s15, 0
        %s100 = scalar_select %p99, %s15, 0
        %s101 = smul.addr %s98, 2
        %s102 = sadd.s32 %s100, %s101
        %s103 = smul.addr %s102, 8
        %s104 = scalar_lea.vmem %s0, %s103
      $region20: #{moving_avg.1} parent=15 // pred_fallthru
        _
    $region16: #{moving_avg.1} parent=5 // pred_fallthru
      _
    %p105 = scmp.le.s32.totalorder 1, %s7
    %p106 = scmp.lt.s32.totalorder %s7, 3
    %p107 = pnand %p105, %p106
    %p108 = pneg %p107
    // Predicated region
    $region21: #{moving_avg.1} parent=5 // pred_check
      _
    $region22: #{moving_avg.1} parent=5 // pred_check_branch
      %110 = sbr.rel (%p107) target = $region24
    $region23: #{moving_avg.1} parent=5 // pred_region
      %s111 = ssub.s32 %s7, 1
      %p112 = scmp.lt.s32.totalorder %s16, 1
      %s113 = scalar_select %p112, %s16, 1
      %p114 = scmp.lt.s32.totalorder %s17, 0
      %s115 = scalar_select %p114, %s17, 0
      %s116 = smul.addr %s113, 2
      %s117 = sadd.s32 %s115, %s116
      %s118 = smul.addr %s117, 8
      %s119 = scalar_lea.vmem %s0, %s118
      %p120 = pneg %p47
      %p121 = pneg %p44
      %p122 = pneg %p75
      %p123 = pneg %p72
      %p124 = scmp.lt.s32.totalorder %s16, 1
      %s125 = scalar_select %p124, %s16, 1
      %p126 = scmp.lt.s32.totalorder %s17, 0
      %s127 = scalar_select %p126, %s17, 0
      %s128 = smul.addr %s125, 2
      %s129 = sadd.s32 %s127, %s128
      %s130 = smul.addr %s129, 8
      %s131 = scalar_lea.vmem %s1, %s130
      %p132 = scmp.lt.s32.totalorder %s16, 1
      %s133 = scalar_select %p132, %s16, 1
      %p134 = scmp.lt.s32.totalorder %s17, 0
      %s135 = scalar_select %p134, %s17, 0
      %s136 = smul.addr %s133, 2
      %s137 = sadd.s32 %s135, %s136
      %s138 = smul.addr %s137, 8
      %s139 = scalar_lea.vmem %s0, %s138
      %p140 = scmp.lt.s32.totalorder %s16, 1
      %s141 = scalar_select %p140, %s16, 1
      %p142 = scmp.lt.s32.totalorder %s17, 0
      %s143 = scalar_select %p142, %s17, 0
      %s144 = smul.addr %s141, 2
      %s145 = sadd.s32 %s143, %s144
      %s146 = smul.addr %s145, 8
      %s147 = scalar_lea.vmem %s1, %s146
      %v148 = vld [vmem:[%s139] sm:$0xff]
      %v149 = vld [vmem:[%s139 + $0x8] sm:$0xff]
      %vm150 = vcmask 64512
      %151 = vst.msk [vmem:[#allocation2 + $0x5] sm:$0xff] %vm150, %v148
      %152 = vst.msk [vmem:[#allocation2 + $0xd] sm:$0xff] %vm150, %v149
      %v153 = vperm.slane %v148, 0
      %vm154 = vcmask 61440
      %155 = vst.msk [vmem:[#allocation2] sm:$0x1f] %vm154, %v153
      %v156 = vperm.slane %v149, 7
      %157 = vst.msk [vmem:[#allocation2 + $0x15] sm:$0x1f] %vm154, %v156
      %v158 = vld [vmem:[#allocation2] sm:$0xff]
      %v159 = vld [vmem:[#allocation2 + $0x8] sm:$0xff]
      %v160 = vld [vmem:[#allocation2 + $0x1] sm:$0xff]
      %v161 = vld [vmem:[#allocation2 + $0x9] sm:$0xff]
      %v162 = vadd.f32 %v158, %v160
      %v163 = vadd.f32 %v159, %v161
      %v164 = vld [vmem:[#allocation2 + $0x2] sm:$0xff]
      %v165 = vld [vmem:[#allocation2 + $0xa] sm:$0xff]
      %v166 = vadd.f32 %v162, %v164
      %v167 = vadd.f32 %v163, %v165
      %v168 = vld [vmem:[#allocation2 + $0x3] sm:$0xff]
      %v169 = vld [vmem:[#allocation2 + $0xb] sm:$0xff]
      %v170 = vadd.f32 %v166, %v168
      %v171 = vadd.f32 %v167, %v169
      %v172 = vld [vmem:[#allocation2 + $0x4] sm:$0xff]
      %v173 = vld [vmem:[#allocation2 + $0xc] sm:$0xff]
      %v174 = vadd.f32 %v170, %v172
      %v175 = vadd.f32 %v171, %v173
      %v176 = vld [vmem:[#allocation2 + $0x5] sm:$0xff]
      %v177 = vld [vmem:[#allocation2 + $0xd] sm:$0xff]
      %v178 = vadd.f32 %v174, %v176
      %v179 = vadd.f32 %v175, %v177
      %v180 = vld [vmem:[#allocation2 + $0x6] sm:$0xff]
      %v181 = vld [vmem:[#allocation2 + $0xe] sm:$0xff]
      %v182 = vadd.f32 %v178, %v180
      %v183 = vadd.f32 %v179, %v181
      %v184 = vld [vmem:[#allocation2 + $0x7] sm:$0xff]
      %v185 = vld [vmem:[#allocation2 + $0xf] sm:$0xff]
      %v186 = vadd.f32 %v182, %v184
      %v187 = vadd.f32 %v183, %v185
      %v188 = vld [vmem:[#allocation2 + $0x10] sm:$0xff]
      %v189 = vadd.f32 %v186, %v159
      %v190 = vadd.f32 %v187, %v188
      %v191 = vld [vmem:[#allocation2 + $0x11] sm:$0xff]
      %v192 = vadd.f32 %v189, %v161
      %v193 = vadd.f32 %v190, %v191
      %v194 = vld [vmem:[#allocation2 + $0x12] sm:$0xff]
      %v195 = vadd.f32 %v192, %v165
      %v196 = vadd.f32 %v193, %v194
      %v197 = vmul.f32 %v195, 0.09090909
      %v198 = vmul.f32 %v196, 0.09090909
      %199 = vst.msk [vmem:[%s147] sm:$0xff] %vm150, %v197
      %200 = vst.msk [vmem:[%s147 + $0x8] sm:$0xff] %vm150, %v198
      %p201 = scmp.lt.s32.totalorder %s16, 1
      %s202 = scalar_select %p201, %s16, 1
      %p203 = scmp.lt.s32.totalorder %s17, 0
      %s204 = scalar_select %p203, %s17, 0
      %s205 = smul.addr %s202, 2
      %s206 = sadd.s32 %s204, %s205
      %s207 = smul.addr %s206, 8
      %s208 = scalar_lea.vmem %s1, %s207
      // Predicated region
      $region25: #{moving_avg.1} parent=23 // pred_check
        %p209 = pneg %p72
      $region26: #{moving_avg.1} parent=23 // pred_check_branch
        %211 = sbr.rel (%p209) target = $region28
      $region27: #{moving_avg.1} parent=23 // pred_region
        _
      $region28: #{moving_avg.1} parent=23 // pred_fallthru
        _
    $region24: #{moving_avg.1} parent=5 // pred_fallthru
      _
    %p212 = scmp.le.s32.totalorder 2, %s7
    // Predicated region
    $region29: #{moving_avg.1} parent=5 // pred_check
      %p213 = pneg %p212
    $region30: #{moving_avg.1} parent=5 // pred_check_branch
      %215 = sbr.rel (%p213) target = $region32
    $region31: #{moving_avg.1} parent=5 // pred_region
      %s216 = ssub.s32 %s7, 2
      // Predicated region
      $region33: #{moving_avg.1} parent=31 // pred_check
        %p217 = pneg %p78
      $region34: #{moving_avg.1} parent=31 // pred_check_branch
        %219 = sbr.rel (%p217) target = $region36
      $region35: #{moving_avg.1} parent=31 // pred_region
        %p220 = scmp.lt.s32.totalorder %s18, 1
        %s221 = scalar_select %p220, %s18, 1
        %p222 = scmp.lt.s32.totalorder %s19, 0
        %s223 = scalar_select %p222, %s19, 0
        %s224 = smul.addr %s221, 2
        %s225 = sadd.s32 %s223, %s224
        %s226 = smul.addr %s225, 8
        %s227 = scalar_lea.vmem %s1, %s226
      $region36: #{moving_avg.1} parent=31 // pred_fallthru
        _
    $region32: #{moving_avg.1} parent=5 // pred_fallthru
      _
  $region6: #{moving_avg.1} parent=0 // loop_footer
    %s11 = sadd.s32 1, %s7
  $region7: #{moving_avg.1} parent=0 // loop_footer_branch
    %6 = sbr.rel target = $region3
  $region8: #{moving_avg.1} parent=0 // loop_exit
    _

</llo_original>
